<compile_context>
chip_gen: v6e
topology: v6e:2x2x1
jax: 0.10.0
libtpu: 0.0.40
codegen_flags: <defaults>
</compile_context>

<pallas_src>
import functools
import math

import jax
import jax.numpy as jnp
from jax.experimental import pallas as pl
from jax.experimental.pallas import tpu as pltpu

EVAL_CAPACITY_TOKEN_FRACTION = 0.25
SAMPLE_FRACTION = 0.2


def _round_up(x, m):
    return ((x + m - 1) // m) * m


def _vmem_capacity_bytes():
    """Per-core VMEM capacity; conservative 64 MiB (v7x) fallback."""
    try:
        info = pltpu.get_tpu_info()
        cap = getattr(info, "vmem_capacity_bytes", None)
        if cap:
            return int(cap)
    except Exception:
        pass
    return 64 * 2**20


def _vmem_need_bytes(TS, D, E, C, isz_x, isz_w, isz_c):
    """Estimated VMEM footprint for one grid step (incl. double buffering)."""
    EC = E * C
    return int(
        2 * TS * D * isz_x            # double-buffered streamed x tiles
        + 2 * TS * EC * isz_c         # double-buffered combine output tiles
        + 2 * TS * EC                 # double-buffered int8 dispatch tiles
        + D * E * isz_w               # resident gate weight
        + TS * TS * 2                 # bf16 lower-triangular scratch
        + TS * EC * (isz_c + 6)       # flat (TS, E*C) temporaries (iota/select/cast)
        + 8 * TS * max(E, 128) * 4    # small (TS, E)/(TS, 1) f32 temporaries
    )


def _choose_token_tile(S, D, E, C, isz_x, isz_w, isz_c, token_tile, budget):
    """Pick (TS, S_pad) so the per-step VMEM footprint fits `budget`."""
    need = lambda ts: _vmem_need_bytes(ts, D, E, C, isz_x, isz_w, isz_c)
    sub_in = max(8, 32 // isz_x)          # sublane multiple for the streamed x tile

    # Option A: one tile covering the whole (padded) token axis.
    ts_full = _round_up(S, sub_in)
    if ts_full <= max(token_tile, sub_in) and need(ts_full) <= budget:
        return ts_full, ts_full

    # Option B: multiple 32-row-aligned tiles (valid for f32/bf16/int8 blocks);
    # shrink until the footprint fits the VMEM budget.
    ts = min(_round_up(token_tile, 32), _round_up(S, 32))
    ts = max(32, (ts // 32) * 32)
    while ts > 32 and need(ts) > budget:
        ts -= 32
    # Prefer a tile size that divides S exactly (skips the wrapper-side pad).
    for cand in range(ts, 31, -32):
        if S % cand == 0:
            return cand, S
    return ts, _round_up(S, ts)


def _top1gate_kernel(x_ref, w_ref,
                     combine_ref, dispatch_ref, laux_ref, counts_ref, ent_ref,
                     cnt_acc, gsum_acc, ent_acc, tri_sc,
                     *, capacity, num_tokens, padded_tokens):
    t = pl.program_id(0)
    TS = x_ref.shape[0]
    E = w_ref.shape[1]
    C = capacity

    @pl.when(t == 0)
    def _init():
        cnt_acc[...] = jnp.zeros_like(cnt_acc)
        gsum_acc[...] = jnp.zeros_like(gsum_acc)
        ent_acc[...] = jnp.zeros_like(ent_acc)
        # Lower-triangular (inclusive-cumsum) matrix, built once and reused.
        rows = jax.lax.broadcasted_iota(jnp.int32, (TS, TS), 0)
        cols = jax.lax.broadcasted_iota(jnp.int32, (TS, TS), 1)
        tri_sc[...] = (cols <= rows).astype(jnp.bfloat16)

    # Per-expert running counts from all previous token tiles (pre-capacity).
    # f32 carry is exact while counts stay below 2**24.
    expert_offset = cnt_acc[...]                                     # (1, E)

    # ---- gate matmul (native dtype operands, f32 accumulation) + softmax ----
    logits = jnp.dot(x_ref[...], w_ref[...],
                     preferred_element_type=jnp.float32)             # (TS, E)
    m = jnp.max(logits, axis=1, keepdims=True)
    ex = jnp.exp(logits - m)
    gates = ex / jnp.sum(ex, axis=1, keepdims=True)                  # (TS, E) f32

    # Validity mask for zero-padded rows (only the last tile can have them).
    if padded_tokens != num_tokens:
        tok = t * TS + jax.lax.broadcasted_iota(jnp.int32, (TS, 1), 0)
        valid = (tok < num_tokens).astype(jnp.float32)               # (TS, 1)
    else:
        valid = None

    # ---- top-1 expert: first-argmax one-hot ----
    eids = jax.lax.broadcasted_iota(jnp.int32, (TS, E), 1)
    gmax = jnp.max(gates, axis=1, keepdims=True)
    idx = jnp.min(jnp.where(gates >= gmax, eids, E), axis=1, keepdims=True)
    mask1 = (eids == idx).astype(jnp.float32)                        # (TS, E)
    if valid is not None:
        mask1 = mask1 * valid

    # ---- streaming statistics (ride in otherwise idle VPU/EUP slots) ----
    tiny = jnp.float32(jnp.finfo(jnp.float32).tiny)
    ent_tok = -jnp.sum(gates * jnp.log(jnp.clip(gates, tiny, 1.0)),
                       axis=1, keepdims=True)                        # (TS, 1)
    g_stats = gates
    if valid is not None:
        ent_tok = ent_tok * valid
        g_stats = gates * valid
    ent_acc[...] += jnp.sum(ent_tok, axis=0, keepdims=True)          # (1, 1)
    gsum_acc[...] += jnp.sum(g_stats, axis=0, keepdims=True)         # (1, E)

    tile_counts = jnp.sum(mask1, axis=0, keepdims=True)              # (1, E)
    cnt_acc[...] = expert_offset + tile_counts

    # ---- token -> capacity-slot locations ----
    # Local inclusive cumsum via the cached (TS, TS) lower-triangular matmul
    # (bf16 operands are exact for 0/1 values; f32 accumulation), plus the
    # carried per-expert offset from previous tiles.
    local_cs = jnp.dot(tri_sc[...], mask1.astype(jnp.bfloat16),
                       preferred_element_type=jnp.float32)           # (TS, E)
    locations1 = local_cs - 1.0 + expert_offset                      # (TS, E)

    # Gate value of the selected expert (pre-capacity, as in the reference).
    gates1_s = jnp.sum(gates * mask1, axis=1, keepdims=True)         # (TS, 1)

    # ---- capacity clipping ----
    mask1c = mask1 * (locations1 < jnp.float32(C)).astype(jnp.float32)
    kept = jnp.sum(mask1c, axis=1, keepdims=True)                    # (TS, 1) 0/1
    loc_s = jnp.sum(locations1 * mask1c, axis=1, keepdims=True)      # (TS, 1)

    # ---- lane-dense flat (E*C) combine / dispatch store ----
    # combine[s, e, c] is nonzero only at (idx[s], loc_s[s]) for kept tokens,
    # i.e. flat lane slot idx*C + loc.  Dropped / padded tokens get slot -1.
    slot = jnp.where(kept > 0.0, idx * C + loc_s.astype(jnp.int32), -1)  # (TS,1)
    ec_ids = jax.lax.broadcasted_iota(jnp.int32, (TS, E * C), 1)
    sel = ec_ids == slot                                             # (TS, E*C)
    gval = gates1_s.astype(combine_ref.dtype)                        # (TS, 1)
    combine_val = jnp.where(sel, gval,
                            jnp.zeros((), dtype=combine_ref.dtype))  # (TS, E*C)
    combine_ref[...] = combine_val
    dispatch_ref[...] = (combine_val != 0).astype(jnp.int8)

    # ---- finalize scalar / per-expert outputs on the last tile ----
    @pl.when(t == pl.num_programs(0) - 1)
    def _finalize():
        inv_s = jnp.float32(1.0 / num_tokens)
        me = gsum_acc[...] * inv_s                                   # (1, E)
        ce = cnt_acc[...] * inv_s                                    # (1, E)
        laux_ref[...] = jnp.sum(me * ce, axis=1, keepdims=True) * jnp.float32(E)
        counts_ref[...] = cnt_acc[...]
        ent_ref[...] = ent_acc[...]


def top1_gate_pallas(x, w, capacity, *, token_tile=1024, combine_dtype=None):
    S, D = x.shape
    D2, E = w.shape
    assert D == D2
    C = int(capacity)
    EC = E * C
    if combine_dtype is None:
        # Reference semantics (combine in the input dtype).  Pass
        # combine_dtype=jnp.bfloat16 to halve the dominant HBM write traffic.
        combine_dtype = x.dtype
    isz = lambda dt: jnp.dtype(dt).itemsize

    cap_bytes = _vmem_capacity_bytes()
    budget = max(cap_bytes - 16 * 2**20, 24 * 2**20)   # headroom for Mosaic scratch
    TS, S_pad = _choose_token_tile(S, D, E, C, isz(x.dtype), isz(w.dtype),
                                   isz(combine_dtype), token_tile, budget)
    n_tiles = S_pad // TS
    if S_pad != S:
        # Padded rows must be exactly zero (see correctness note at top).
        x = jnp.pad(x, ((0, S_pad - S), (0, 0)))

    need = _vmem_need_bytes(TS, D, E, C, isz(x.dtype), isz(w.dtype),
                            isz(combine_dtype))
    vmem_limit = int(min(cap_bytes, max(need + 12 * 2**20, 32 * 2**20)))

    kernel = functools.partial(_top1gate_kernel, capacity=C,
                               num_tokens=S, padded_tokens=S_pad)

    combine_flat, dispatch_flat, laux, counts, ent = pl.pallas_call(
        kernel,
        out_shape=(
            jax.ShapeDtypeStruct((S_pad, EC), combine_dtype),  # combine (flat)
            jax.ShapeDtypeStruct((S_pad, EC), jnp.int8),       # dispatch (flat)
            jax.ShapeDtypeStruct((1, 1), jnp.float32),         # l_aux
            jax.ShapeDtypeStruct((1, E), jnp.float32),         # pre-cap counts
            jax.ShapeDtypeStruct((1, 1), jnp.float32),         # entropy sum
        ),
        grid=(n_tiles,),
        in_specs=[
            pl.BlockSpec((TS, D), lambda t: (t, 0)),   # streamed token tile
            pl.BlockSpec((D, E), lambda t: (0, 0)),    # gate weight, resident
        ],
        out_specs=(
            pl.BlockSpec((TS, EC), lambda t: (t, 0)),
            pl.BlockSpec((TS, EC), lambda t: (t, 0)),
            pl.BlockSpec((1, 1), lambda t: (0, 0)),
            pl.BlockSpec((1, E), lambda t: (0, 0)),
            pl.BlockSpec((1, 1), lambda t: (0, 0)),
        ),
        scratch_shapes=[
            pltpu.VMEM((1, E), jnp.float32),       # running per-expert counts
            pltpu.VMEM((1, E), jnp.float32),       # running per-expert gate sums
            pltpu.VMEM((1, 1), jnp.float32),       # running entropy sum
            pltpu.VMEM((TS, TS), jnp.bfloat16),    # cached triangular matrix
        ],
        compiler_params=pltpu.CompilerParams(
            dimension_semantics=("arbitrary",),   # carried offsets => sequential
            vmem_limit_bytes=vmem_limit),
    )(x, w)

    # Row-major split of the last dim: free reshape, no data movement.
    combine = combine_flat.reshape(S_pad, E, C)
    dispatch = dispatch_flat.reshape(S_pad, E, C)
    if S_pad != S:
        combine = combine[:S]
        dispatch = dispatch[:S]
    return combine, dispatch.astype(jnp.bool_), laux[0, 0], counts[0], ent[0, 0]


def top1_gate_forward(x, w, *, capacity_factor=1.0, eval_mode=False,
                      moe_eval_capacity_token_fraction=EVAL_CAPACITY_TOKEN_FRACTION,
                      token_tile=1024, combine_dtype=None):
    """Mirrors Top1Gate.forward(input) with mask=None."""
    S, D = x.shape
    E = w.shape[1]

    if moe_eval_capacity_token_fraction > 0.0 and eval_mode:
        capacity = math.ceil(moe_eval_capacity_token_fraction * S)
    else:
        capacity = int(capacity_factor * math.ceil(S / E))

    combine_sec, dispatch_mask, l_aux, counts, ent_sum = top1_gate_pallas(
        x, w, capacity, token_tile=token_tile, combine_dtype=combine_dtype)

    # ---- metadata (cheap glue on tiny kernel outputs; plain JAX) ----
    metadata = {}
    metadata["entropy_gating"] = ent_sum / S
    expert1_hist = 100.0 * counts / S
    metadata["unused_expert1_count"] = jnp.sum(expert1_hist == 0)
    expert1_hist = jnp.sort(expert1_hist)[::-1] + jnp.finfo(jnp.float32).tiny
    sample_count = max(math.ceil(E * SAMPLE_FRACTION), 1)
    metadata["expert1_balance_top"] = jnp.sum(expert1_hist[:sample_count])
    metadata["expert1_balance_bottom"] = jnp.sum(expert1_hist[-sample_count:])

    return l_aux, combine_sec, dispatch_mask, metadata


# ---------------------------- pure-JAX reference ----------------------------
def _top1gating_reference(x, w, capacity):
    logits = jnp.dot(x, w, precision=jax.lax.Precision.HIGHEST)
    gates = jax.nn.softmax(logits, axis=1)
    S, E = gates.shape
    idx = jnp.argmax(gates, axis=1)
    mask1 = jax.nn.one_hot(idx, E, dtype=jnp.float32)
    counts = jnp.sum(mask1, axis=0)
    locations1 = jnp.cumsum(mask1, axis=0) - 1.0
    gates1_s = jnp.sum(gates * mask1, axis=1)
    me = jnp.mean(gates, axis=0)
    ce = jnp.mean(mask1, axis=0)
    l_aux = jnp.mean(me * ce) * E * E
    mask1 = mask1 * (locations1 < capacity).astype(jnp.float32)
    locations1_s = jnp.sum(locations1 * mask1, axis=1)
    gates1 = gates1_s[:, None] * mask1
    loc_sc = jax.nn.one_hot(locations1_s.astype(jnp.int32), capacity,
                            dtype=jnp.float32)
    combine = gates1[:, :, None] * loc_sc[:, None, :]
    return combine, l_aux, counts


def _check_case(S, D, E, token_tile, combine_dtype=None, seed=0,
                rtol=1e-4, atol=1e-5):
    key = jax.random.PRNGKey(seed)
    kx, kw = jax.random.split(key)
    x = jax.random.normal(kx, (S, D), dtype=jnp.float32)
    bound = 1.0 / math.sqrt(D)
    w = jax.random.uniform(kw, (D, E), minval=-bound, maxval=bound,
                           dtype=jnp.float32)

    l_aux, combine, dispatch_mask, metadata = top1_gate_forward(
        x, w, capacity_factor=1.0, eval_mode=False, token_tile=token_tile,
        combine_dtype=combine_dtype)
    jax.block_until_ready((l_aux, combine, dispatch_mask,
                           metadata["entropy_gating"]))

    capacity = int(math.ceil(S / E))
    assert combine.shape == (S, E, capacity)
    assert dispatch_mask.shape == combine.shape
    assert dispatch_mask.dtype == jnp.bool_

    ref_combine, ref_laux, ref_counts = _top1gating_reference(x, w, capacity)
    assert jnp.allclose(combine.astype(jnp.float32), ref_combine,
                        rtol=rtol, atol=atol), \
        f"combine mismatch (S={S}, combine_dtype={combine_dtype})"
    assert jnp.array_equal(dispatch_mask, ref_combine != 0.0), \
        f"dispatch_mask mismatch (S={S})"
    assert jnp.allclose(l_aux, ref_laux, rtol=1e-4, atol=1e-6), \
        f"l_aux mismatch (S={S})"


if __name__ == "__main__":
    # Small shapes consistent with the module: S tokens, model_dim D, E experts.
    # Case 1: single tile, no padding.
    _check_case(S=16, D=32, E=4, token_tile=256)
    # Case 2: single tile, padded last rows (S not a multiple of 8).
    _check_case(S=20, D=32, E=4, token_tile=256)
    # Case 3: multiple token tiles, TS divides S (no wrapper pad; exercises the
    # carried per-expert offsets and capacity drops).
    _check_case(S=128, D=32, E=4, token_tile=32)
    # Case 4: multiple token tiles with a padded last tile.
    _check_case(S=100, D=32, E=4, token_tile=32)
    # Case 5: bf16 combine output (halved HBM write traffic), looser tolerance.
    _check_case(S=128, D=32, E=4, token_tile=32, combine_dtype=jnp.bfloat16,
                rtol=2e-2, atol=5e-3)

    print("KERNEL_OK")
</pallas_src>

<mosaic_0001>
module attributes {stable_mosaic.version = 11 : i64} {
  func.func @_top1gate_kernel(%arg0: i32, %arg1: memref<16x32xf32, #tpu.memory_space<vmem>>, %arg2: memref<32x4xf32, #tpu.memory_space<vmem>>, %arg3: memref<16x16xf32, #tpu.memory_space<vmem>>, %arg4: memref<16x16xi8, #tpu.memory_space<vmem>>, %arg5: memref<1x1xf32, #tpu.memory_space<vmem>>, %arg6: memref<1x4xf32, #tpu.memory_space<vmem>>, %arg7: memref<1x1xf32, #tpu.memory_space<vmem>>, %arg8: memref<1x4xf32, #tpu.memory_space<vmem>>, %arg9: memref<1x4xf32, #tpu.memory_space<vmem>>, %arg10: memref<1x1xf32, #tpu.memory_space<vmem>>, %arg11: memref<16x16xbf16, #tpu.memory_space<vmem>>) attributes {dimension_semantics = [#tpu.dimension_semantics<arbitrary>], iteration_bounds = array<i64: 1>, scalar_prefetch = 0 : i64, scratch_operands = 4 : i64, tpu.core_type = #tpu.core_type<tc>, window_params = [{transform_indices = @transform_0, window_bounds = array<i64: 16, 32>}, {pipeline_mode = #tpu.pipeline_mode<synchronous>, transform_indices = @transform_1, window_bounds = array<i64: 32, 4>}, {transform_indices = @transform_2, window_bounds = array<i64: 16, 16>}, {transform_indices = @transform_3, window_bounds = array<i64: 16, 16>}, {pipeline_mode = #tpu.pipeline_mode<synchronous>, transform_indices = @transform_4, window_bounds = array<i64: 1, 1>}, {pipeline_mode = #tpu.pipeline_mode<synchronous>, transform_indices = @transform_5, window_bounds = array<i64: 1, 4>}, {pipeline_mode = #tpu.pipeline_mode<synchronous>, transform_indices = @transform_6, window_bounds = array<i64: 1, 1>}]} {
    %c0_i32 = arith.constant 0 : i32
    %0 = arith.cmpi eq, %arg0, %c0_i32 : i32
    %1 = arith.extui %0 : i1 to i32
    %c0_i32_0 = arith.constant 0 : i32
    %2 = arith.cmpi ne, %1, %c0_i32_0 : i32
    scf.if %2 {
      %cst_45 = arith.constant 0.000000e+00 : f32
      %96 = vector.broadcast %cst_45 : f32 to vector<1x4xf32>
      %c0_46 = arith.constant 0 : index
      %c0_47 = arith.constant 0 : index
      %97 = vector.load %arg8[%c0_46, %c0_47] : memref<1x4xf32, #tpu.memory_space<vmem>>, vector<1x4xf32>
      tpu.vector_store %arg8[%c0_46, %c0_47], %96 {strides = array<i32>} : memref<1x4xf32, #tpu.memory_space<vmem>>, vector<1x4xf32>,
      %cst_48 = arith.constant 0.000000e+00 : f32
      %98 = vector.broadcast %cst_48 : f32 to vector<1x4xf32>
      %c0_49 = arith.constant 0 : index
      %c0_50 = arith.constant 0 : index
      %99 = vector.load %arg9[%c0_49, %c0_50] : memref<1x4xf32, #tpu.memory_space<vmem>>, vector<1x4xf32>
      tpu.vector_store %arg9[%c0_49, %c0_50], %98 {strides = array<i32>} : memref<1x4xf32, #tpu.memory_space<vmem>>, vector<1x4xf32>,
      %cst_51 = arith.constant 0.000000e+00 : f32
      %100 = vector.broadcast %cst_51 : f32 to vector<1x1xf32>
      %c0_52 = arith.constant 0 : index
      %c0_53 = arith.constant 0 : index
      %101 = vector.load %arg10[%c0_52, %c0_53] : memref<1x1xf32, #tpu.memory_space<vmem>>, vector<1x1xf32>
      tpu.vector_store %arg10[%c0_52, %c0_53], %100 {strides = array<i32>} : memref<1x1xf32, #tpu.memory_space<vmem>>, vector<1x1xf32>,
      %102 = tpu.iota {dimensions = array<i32: 0>} : vector<16x16xi32>
      %103 = tpu.iota {dimensions = array<i32: 1>} : vector<16x16xi32>
      %104 = arith.cmpi sle, %103, %102 : vector<16x16xi32>
      %105 = arith.extui %104 : vector<16x16xi1> to vector<16x16xi32>
      %106 = arith.sitofp %105 : vector<16x16xi32> to vector<16x16xf32>
      %107 = arith.truncf %106 : vector<16x16xf32> to vector<16x16xbf16>
      %c0_54 = arith.constant 0 : index
      %c0_55 = arith.constant 0 : index
      %108 = vector.load %arg11[%c0_54, %c0_55] : memref<16x16xbf16, #tpu.memory_space<vmem>>, vector<16x16xbf16>
      tpu.vector_store %arg11[%c0_54, %c0_55], %107 {strides = array<i32>} : memref<16x16xbf16, #tpu.memory_space<vmem>>, vector<16x16xbf16>,
    } else {
    }
    %c0 = arith.constant 0 : index
    %c0_1 = arith.constant 0 : index
    %3 = vector.load %arg8[%c0, %c0_1] : memref<1x4xf32, #tpu.memory_space<vmem>>, vector<1x4xf32>
    %c0_2 = arith.constant 0 : index
    %c0_3 = arith.constant 0 : index
    %4 = vector.load %arg1[%c0_2, %c0_3] : memref<16x32xf32, #tpu.memory_space<vmem>>, vector<16x32xf32>
    %c0_4 = arith.constant 0 : index
    %c0_5 = arith.constant 0 : index
    %5 = vector.load %arg2[%c0_4, %c0_5] : memref<32x4xf32, #tpu.memory_space<vmem>>, vector<32x4xf32>
    %cst = arith.constant dense<0.000000e+00> : vector<16x4xf32>
    %6 = tpu.matmul %4, %5, %cst {dimension_numbers = #tpu.dot_dimension_numbers<[1], [0], [0], [1], [0, 0, 1, 1], [], []>} : vector<16x32xf32>, vector<32x4xf32>, vector<16x4xf32> -> vector<16x4xf32>
    %cst_6 = arith.constant dense<0xFF800000> : vector<16xf32>
    %7 = vector.multi_reduction <maximumf>, %6, %cst_6 [1] : vector<16x4xf32> to vector<16xf32>
    %8 = vector.shape_cast %7 : vector<16xf32> to vector<16x1xf32>
    %9 = vector.broadcast %8 : vector<16x1xf32> to vector<16x4xf32>
    %10 = arith.subf %6, %9 : vector<16x4xf32>
    %11 = math.exp %10 : vector<16x4xf32>
    %cst_7 = arith.constant dense<0.000000e+00> : vector<16xf32>
    %12 = vector.multi_reduction <add>, %11, %cst_7 [1] : vector<16x4xf32> to vector<16xf32>
    %13 = vector.shape_cast %12 : vector<16xf32> to vector<16x1xf32>
    %14 = vector.broadcast %13 : vector<16x1xf32> to vector<16x4xf32>
    %15 = arith.divf %11, %14 : vector<16x4xf32>
    %16 = tpu.iota {dimensions = array<i32: 1>} : vector<16x4xi32>
    %cst_8 = arith.constant dense<0xFF800000> : vector<16xf32>
    %17 = vector.multi_reduction <maximumf>, %15, %cst_8 [1] : vector<16x4xf32> to vector<16xf32>
    %18 = vector.shape_cast %17 : vector<16xf32> to vector<16x1xf32>
    %19 = vector.broadcast %18 : vector<16x1xf32> to vector<16x4xf32>
    %20 = arith.cmpf oge, %15, %19 : vector<16x4xf32>
    %c4_i32 = arith.constant 4 : i32
    %21 = vector.broadcast %c4_i32 : i32 to vector<16x4xi32>
    %22 = arith.select %20, %16, %21 : vector<16x4xi1>, vector<16x4xi32>
    %cst_9 = arith.constant dense<2147483647> : vector<16xi32>
    %23 = vector.multi_reduction <minsi>, %22, %cst_9 [1] : vector<16x4xi32> to vector<16xi32>
    %24 = vector.shape_cast %23 : vector<16xi32> to vector<16x1xi32>
    %25 = vector.broadcast %24 : vector<16x1xi32> to vector<16x4xi32>
    %26 = arith.cmpi eq, %16, %25 : vector<16x4xi32>
    %27 = arith.extui %26 : vector<16x4xi1> to vector<16x4xi32>
    %28 = arith.sitofp %27 : vector<16x4xi32> to vector<16x4xf32>
    %cst_10 = arith.constant 1.17549435E-38 : f32
    %cst_11 = arith.constant 1.000000e+00 : f32
    %29 = vector.broadcast %cst_10 : f32 to vector<16x4xf32>
    %30 = arith.maximumf %29, %15 : vector<16x4xf32>
    %31 = vector.broadcast %cst_11 : f32 to vector<16x4xf32>
    %32 = arith.minimumf %31, %30 : vector<16x4xf32>
    %33 = math.log %32 : vector<16x4xf32>
    %34 = arith.mulf %15, %33 : vector<16x4xf32>
    %cst_12 = arith.constant dense<0.000000e+00> : vector<16xf32>
    %35 = vector.multi_reduction <add>, %34, %cst_12 [1] : vector<16x4xf32> to vector<16xf32>
    %36 = vector.shape_cast %35 : vector<16xf32> to vector<16x1xf32>
    %cst_13 = arith.constant 0.000000e+00 : f32
    %37 = vector.broadcast %cst_13 : f32 to vector<16x1xf32>
    %38 = arith.subf %37, %36 : vector<16x1xf32>
    %c0_14 = arith.constant 0 : index
    %c0_15 = arith.constant 0 : index
    %39 = vector.load %arg10[%c0_14, %c0_15] : memref<1x1xf32, #tpu.memory_space<vmem>>, vector<1x1xf32>
    %cst_16 = arith.constant dense<0.000000e+00> : vector<1xf32>
    %40 = vector.multi_reduction <add>, %38, %cst_16 [0] : vector<16x1xf32> to vector<1xf32>
    %41 = vector.shape_cast %40 : vector<1xf32> to vector<1x1xf32>
    %42 = arith.addf %39, %41 : vector<1x1xf32>
    %c0_17 = arith.constant 0 : index
    %c0_18 = arith.constant 0 : index
    %43 = vector.load %arg10[%c0_17, %c0_18] : memref<1x1xf32, #tpu.memory_space<vmem>>, vector<1x1xf32>
    tpu.vector_store %arg10[%c0_17, %c0_18], %42 {strides = array<i32>} : memref<1x1xf32, #tpu.memory_space<vmem>>, vector<1x1xf32>,
    %c0_19 = arith.constant 0 : index
    %c0_20 = arith.constant 0 : index
    %44 = vector.load %arg9[%c0_19, %c0_20] : memref<1x4xf32, #tpu.memory_space<vmem>>, vector<1x4xf32>
    %cst_21 = arith.constant dense<0.000000e+00> : vector<4xf32>
    %45 = vector.multi_reduction <add>, %15, %cst_21 [0] : vector<16x4xf32> to vector<4xf32>
    %46 = vector.shape_cast %45 : vector<4xf32> to vector<1x4xf32>
    %47 = arith.addf %44, %46 : vector<1x4xf32>
    %c0_22 = arith.constant 0 : index
    %c0_23 = arith.constant 0 : index
    %48 = vector.load %arg9[%c0_22, %c0_23] : memref<1x4xf32, #tpu.memory_space<vmem>>, vector<1x4xf32>
    tpu.vector_store %arg9[%c0_22, %c0_23], %47 {strides = array<i32>} : memref<1x4xf32, #tpu.memory_space<vmem>>, vector<1x4xf32>,
    %cst_24 = arith.constant dense<0.000000e+00> : vector<4xf32>
    %49 = vector.multi_reduction <add>, %28, %cst_24 [0] : vector<16x4xf32> to vector<4xf32>
    %50 = vector.shape_cast %49 : vector<4xf32> to vector<1x4xf32>
    %51 = arith.addf %3, %50 : vector<1x4xf32>
    %c0_25 = arith.constant 0 : index
    %c0_26 = arith.constant 0 : index
    %52 = vector.load %arg8[%c0_25, %c0_26] : memref<1x4xf32, #tpu.memory_space<vmem>>, vector<1x4xf32>
    tpu.vector_store %arg8[%c0_25, %c0_26], %51 {strides = array<i32>} : memref<1x4xf32, #tpu.memory_space<vmem>>, vector<1x4xf32>,
    %c0_27 = arith.constant 0 : index
    %c0_28 = arith.constant 0 : index
    %53 = vector.load %arg11[%c0_27, %c0_28] : memref<16x16xbf16, #tpu.memory_space<vmem>>, vector<16x16xbf16>
    %54 = arith.truncf %28 : vector<16x4xf32> to vector<16x4xbf16>
    %cst_29 = arith.constant dense<0.000000e+00> : vector<16x4xf32>
    %55 = tpu.matmul %53, %54, %cst_29 {dimension_numbers = #tpu.dot_dimension_numbers<[1], [0], [0], [1], [0, 0, 1, 1], [], []>} : vector<16x16xbf16>, vector<16x4xbf16>, vector<16x4xf32> -> vector<16x4xf32>
    %cst_30 = arith.constant 1.000000e+00 : f32
    %56 = vector.broadcast %cst_30 : f32 to vector<16x4xf32>
    %57 = arith.subf %55, %56 : vector<16x4xf32>
    %58 = vector.broadcast %3 : vector<1x4xf32> to vector<16x4xf32>
    %59 = arith.addf %57, %58 : vector<16x4xf32>
    %60 = arith.mulf %15, %28 : vector<16x4xf32>
    %cst_31 = arith.constant dense<0.000000e+00> : vector<16xf32>
    %61 = vector.multi_reduction <add>, %60, %cst_31 [1] : vector<16x4xf32> to vector<16xf32>
    %62 = vector.shape_cast %61 : vector<16xf32> to vector<16x1xf32>
    %cst_32 = arith.constant 4.000000e+00 : f32
    %63 = vector.broadcast %cst_32 : f32 to vector<16x4xf32>
    %64 = arith.cmpf olt, %59, %63 : vector<16x4xf32>
    %65 = arith.extui %64 : vector<16x4xi1> to vector<16x4xi32>
    %66 = arith.sitofp %65 : vector<16x4xi32> to vector<16x4xf32>
    %67 = arith.mulf %28, %66 : vector<16x4xf32>
    %cst_33 = arith.constant dense<0.000000e+00> : vector<16xf32>
    %68 = vector.multi_reduction <add>, %67, %cst_33 [1] : vector<16x4xf32> to vector<16xf32>
    %69 = vector.shape_cast %68 : vector<16xf32> to vector<16x1xf32>
    %70 = arith.mulf %59, %67 : vector<16x4xf32>
    %cst_34 = arith.constant dense<0.000000e+00> : vector<16xf32>
    %71 = vector.multi_reduction <add>, %70, %cst_34 [1] : vector<16x4xf32> to vector<16xf32>
    %72 = vector.shape_cast %71 : vector<16xf32> to vector<16x1xf32>
    %cst_35 = arith.constant 0.000000e+00 : f32
    %73 = vector.broadcast %cst_35 : f32 to vector<16x1xf32>
    %74 = arith.cmpf ogt, %69, %73 : vector<16x1xf32>
    %c4_i32_36 = arith.constant 4 : i32
    %75 = vector.broadcast %c4_i32_36 : i32 to vector<16x1xi32>
    %76 = arith.muli %24, %75 : vector<16x1xi32>
    %77 = arith.fptosi %72 : vector<16x1xf32> to vector<16x1xi32>
    %78 = arith.addi %76, %77 : vector<16x1xi32>
    %c-1_i32 = arith.constant -1 : i32
    %79 = vector.broadcast %c-1_i32 : i32 to vector<16x1xi32>
    %80 = arith.select %74, %78, %79 : vector<16x1xi1>, vector<16x1xi32>
    %81 = tpu.iota {dimensions = array<i32: 1>} : vector<16x16xi32>
    %82 = vector.broadcast %80 : vector<16x1xi32> to vector<16x16xi32>
    %83 = arith.cmpi eq, %81, %82 : vector<16x16xi32>
    %cst_37 = arith.constant 0.000000e+00 : f32
    %84 = vector.shape_cast %62 : vector<16x1xf32> to vector<16x1xf32>
    %85 = vector.broadcast %84 : vector<16x1xf32> to vector<16x16xf32>
    %86 = vector.broadcast %cst_37 : f32 to vector<16x16xf32>
    %87 = arith.select %83, %85, %86 : vector<16x16xi1>, vector<16x16xf32>
    %c0_38 = arith.constant 0 : index
    %c0_39 = arith.constant 0 : index
    %88 = vector.load %arg3[%c0_38, %c0_39] : memref<16x16xf32, #tpu.memory_space<vmem>>, vector<16x16xf32>
    tpu.vector_store %arg3[%c0_38, %c0_39], %87 {strides = array<i32>} : memref<16x16xf32, #tpu.memory_space<vmem>>, vector<16x16xf32>,
    %cst_40 = arith.constant 0.000000e+00 : f32
    %89 = vector.broadcast %cst_40 : f32 to vector<16x16xf32>
    %90 = arith.cmpf one, %87, %89 : vector<16x16xf32>
    %91 = arith.extui %90 : vector<16x16xi1> to vector<16x16xi8>
    %c0_41 = arith.constant 0 : index
    %c0_42 = arith.constant 0 : index
    %92 = vector.load %arg4[%c0_41, %c0_42] : memref<16x16xi8, #tpu.memory_space<vmem>>, vector<16x16xi8>
    tpu.vector_store %arg4[%c0_41, %c0_42], %91 {strides = array<i32>} : memref<16x16xi8, #tpu.memory_space<vmem>>, vector<16x16xi8>,
    %c0_i32_43 = arith.constant 0 : i32
    %93 = arith.cmpi eq, %arg0, %c0_i32_43 : i32
    %94 = arith.extui %93 : i1 to i32
    %c0_i32_44 = arith.constant 0 : i32
    %95 = arith.cmpi ne, %94, %c0_i32_44 : i32
    scf.if %95 {
      %c0_45 = arith.constant 0 : index
      %c0_46 = arith.constant 0 : index
      %96 = vector.load %arg9[%c0_45, %c0_46] : memref<1x4xf32, #tpu.memory_space<vmem>>, vector<1x4xf32>
      %cst_47 = arith.constant 6.250000e-02 : f32
      %97 = vector.broadcast %cst_47 : f32 to vector<1x4xf32>
      %98 = arith.mulf %96, %97 : vector<1x4xf32>
      %c0_48 = arith.constant 0 : index
      %c0_49 = arith.constant 0 : index
      %99 = vector.load %arg8[%c0_48, %c0_49] : memref<1x4xf32, #tpu.memory_space<vmem>>, vector<1x4xf32>
      %cst_50 = arith.constant 6.250000e-02 : f32
      %100 = vector.broadcast %cst_50 : f32 to vector<1x4xf32>
      %101 = arith.mulf %99, %100 : vector<1x4xf32>
      %102 = arith.mulf %98, %101 : vector<1x4xf32>
      %cst_51 = arith.constant dense<0.000000e+00> : vector<1xf32>
      %103 = vector.multi_reduction <add>, %102, %cst_51 [1] : vector<1x4xf32> to vector<1xf32>
      %104 = vector.shape_cast %103 : vector<1xf32> to vector<1x1xf32>
      %cst_52 = arith.constant 4.000000e+00 : f32
      %105 = vector.broadcast %cst_52 : f32 to vector<1x1xf32>
      %106 = arith.mulf %104, %105 : vector<1x1xf32>
      %c0_53 = arith.constant 0 : index
      %c0_54 = arith.constant 0 : index
      %107 = vector.load %arg5[%c0_53, %c0_54] : memref<1x1xf32, #tpu.memory_space<vmem>>, vector<1x1xf32>
      tpu.vector_store %arg5[%c0_53, %c0_54], %106 {strides = array<i32>} : memref<1x1xf32, #tpu.memory_space<vmem>>, vector<1x1xf32>,
      %c0_55 = arith.constant 0 : index
      %c0_56 = arith.constant 0 : index
      %108 = vector.load %arg8[%c0_55, %c0_56] : memref<1x4xf32, #tpu.memory_space<vmem>>, vector<1x4xf32>
      %c0_57 = arith.constant 0 : index
      %c0_58 = arith.constant 0 : index
      %109 = vector.load %arg6[%c0_57, %c0_58] : memref<1x4xf32, #tpu.memory_space<vmem>>, vector<1x4xf32>
      tpu.vector_store %arg6[%c0_57, %c0_58], %108 {strides = array<i32>} : memref<1x4xf32, #tpu.memory_space<vmem>>, vector<1x4xf32>,
      %c0_59 = arith.constant 0 : index
      %c0_60 = arith.constant 0 : index
      %110 = vector.load %arg10[%c0_59, %c0_60] : memref<1x1xf32, #tpu.memory_space<vmem>>, vector<1x1xf32>
      %c0_61 = arith.constant 0 : index
      %c0_62 = arith.constant 0 : index
      %111 = vector.load %arg7[%c0_61, %c0_62] : memref<1x1xf32, #tpu.memory_space<vmem>>, vector<1x1xf32>
      tpu.vector_store %arg7[%c0_61, %c0_62], %110 {strides = array<i32>} : memref<1x1xf32, #tpu.memory_space<vmem>>, vector<1x1xf32>,
    } else {
    }
    return
  }
  func.func @transform_0(%arg0: i32) -> (i32, i32) {
    %c0_i32 = arith.constant 0 : i32
    %c0_i32_0 = arith.constant 0 : i32
    return %arg0, %c0_i32 : i32, i32
  }
  func.func @transform_1(%arg0: i32) -> (i32, i32) {
    %c0_i32 = arith.constant 0 : i32
    %c0_i32_0 = arith.constant 0 : i32
    %c0_i32_1 = arith.constant 0 : i32
    return %c0_i32, %c0_i32_0 : i32, i32
  }
  func.func @transform_2(%arg0: i32) -> (i32, i32) {
    %c0_i32 = arith.constant 0 : i32
    %c0_i32_0 = arith.constant 0 : i32
    return %arg0, %c0_i32 : i32, i32
  }
  func.func @transform_3(%arg0: i32) -> (i32, i32) {
    %c0_i32 = arith.constant 0 : i32
    %c0_i32_0 = arith.constant 0 : i32
    return %arg0, %c0_i32 : i32, i32
  }
  func.func @transform_4(%arg0: i32) -> (i32, i32) {
    %c0_i32 = arith.constant 0 : i32
    %c0_i32_0 = arith.constant 0 : i32
    %c0_i32_1 = arith.constant 0 : i32
    return %c0_i32, %c0_i32_0 : i32, i32
  }
  func.func @transform_5(%arg0: i32) -> (i32, i32) {
    %c0_i32 = arith.constant 0 : i32
    %c0_i32_0 = arith.constant 0 : i32
    %c0_i32_1 = arith.constant 0 : i32
    return %c0_i32, %c0_i32_0 : i32, i32
  }
  func.func @transform_6(%arg0: i32) -> (i32, i32) {
    %c0_i32 = arith.constant 0 : i32
    %c0_i32_0 = arith.constant 0 : i32
    %c0_i32_1 = arith.constant 0 : i32
    return %c0_i32, %c0_i32_0 : i32, i32
  }
}

</mosaic_0001>

<llo_original>
// kernel: tpu_custom_call.1
$region0: #{tpu_custom_call.1}
  #allocation0 [shape = 'u32[]', space=smem, size = 0x4, offset = 0x4, fixed_abs, tag = 'smem constant byte address 0x4 - core index']
  #allocation1 [shape = 'u32[144,128]{1,0:T(1,128)}', space=vmem, size = 0x12000, scoped, tag = 'internal scratch']
  #allocation2 [shape = 'f32[1,4]{1,0:T(1,128)}', space=vmem, size = 0x200, scoped, tag = 'scratch operand']
  #allocation3 [shape = 'f32[1,4]{1,0:T(1,128)}', space=vmem, size = 0x200, scoped, tag = 'scratch operand']
  #allocation4 [shape = 'f32[1,1]{1,0:T(1,128)}', space=vmem, size = 0x200, scoped, tag = 'scratch operand']
  #allocation5 [shape = 'bf16[16,16]{1,0:T(8,128)(2,1)}', space=vmem, size = 0x1000, scoped, tag = 'scratch operand']
  %s0 = inlined_call_operand.vmem [shape: f32[16,32], index: 0, kind: input, shape index: {}]
  %s1 = inlined_call_operand.vmem [shape: f32[32,4], index: 1, kind: input, shape index: {}]
  %s2 = inlined_call_operand.hbm [shape: f32[16,16], index: 2, kind: output, shape index: {0}]
  %s3 = inlined_call_operand.hbm [shape: s8[16,16], index: 3, kind: output, shape index: {1}]
  %s4 = inlined_call_operand.hbm [shape: f32[1,1], index: 4, kind: output, shape index: {2}]
  %s5 = inlined_call_operand.hbm [shape: f32[1,4], index: 5, kind: output, shape index: {3}]
  %s6 = inlined_call_operand.hbm [shape: f32[1,1], index: 6, kind: output, shape index: {4}]
  %7 = xla_tuple %s2, %s3, %s4, %s5, %s6
  %s8 = sld [smem:[#allocation0]]
  $region58: #{tpu_custom_call.1} parent=0
    _
  %s10 = ssub.s32 1, %s8
  %s11 = scalar_select 0, %s10, %s8
  $region1: #{tpu_custom_call.1} parent=0
    #allocation6 [shape = 'u8[8192]{0}', space=vmem, size = 0x2000, scoped, tag = 'output window, operand 0, single buffered']
    #allocation7 [shape = 's32[1]{0}', space=sflag, size = 0x4, scoped, tag = 'scoped memory for tpu_custom_call.1']
    #allocation8 [shape = 'u8[2048]{0}', space=vmem, size = 0x800, scoped, tag = 'output window, operand 1, single buffered']
    #allocation9 [shape = 's32[1]{0}', space=sflag, size = 0x4, scoped, tag = 'scoped memory for tpu_custom_call.1']
    #allocation10 [shape = 'u8[512]{0}', space=vmem, size = 0x400, scoped, tag = 'output window, operand 2, single buffered']
    #allocation11 [shape = 'u8[512]{0}', space=vmem, size = 0x400, scoped, tag = 'output window, operand 3, single buffered']
    #allocation12 [shape = 's32[1]{0}', space=sflag, size = 0x4, scoped, tag = 'scoped memory for tpu_custom_call.1']
    #allocation13 [shape = 'u8[512]{0}', space=vmem, size = 0x400, scoped, tag = 'output window, operand 4, single buffered']
    %12 = vsyncpa [#allocation7], 0
    %13 = vsyncpa [#allocation9], 0
    %14 = vsyncpa [#allocation12], 0
    // Predicated region
    $region2: #{tpu_custom_call.1} parent=1 // pred_check
      _
    $region3: #{tpu_custom_call.1} parent=1 // pred_check_branch
      %16 = sbr.rel (0) target = $region5
    $region4: #{tpu_custom_call.1} parent=1 // pred_region
      _
    $region5: #{tpu_custom_call.1} parent=1 // pred_fallthru
      _
    // Predicated region
    $region6: #{tpu_custom_call.1} parent=1 // pred_check
      _
    $region7: #{tpu_custom_call.1} parent=1 // pred_check_branch
      %18 = sbr.rel (0) target = $region9
    $region8: #{tpu_custom_call.1} parent=1 // pred_region
      _
    $region9: #{tpu_custom_call.1} parent=1 // pred_fallthru
      _
    %p22 = scmp.eq.s32.totalorder 0, 0
    // Predicated region
    $region10: #{tpu_custom_call.1} parent=1 // pred_check
      %p23 = pneg %p22
    $region11: #{tpu_custom_call.1} parent=1 // pred_check_branch
      %25 = sbr.rel (%p23) target = $region13
    $region12: #{tpu_custom_call.1} parent=1 // pred_region
      %vm26 = vcmask 24576
      %27 = vst.msk [vmem:[#allocation2] sm:$0x1] %vm26, 0.0
      %28 = vst.msk [vmem:[#allocation3] sm:$0x1] %vm26, 0.0
      %vm29 = vcmask 0
      %30 = vst.msk [vmem:[#allocation4] sm:$0x1] %vm29, 0.0
      %v31 = vlaneseq
      %v32 = vshrl.u32 %v31, 7
      %v33 = vadd.s32 %v32, 8
      %v34 = vlaneseq
      %v35 = vand.u32 %v34, 127
      %vm36 = vcmp.le.s32.totalorder %v35, %v32
      %vm37 = vcmp.le.s32.totalorder %v35, %v33
      %v38 = vsel %vm36, 1, 0
      %v39 = vsel %vm37, 1, 0
      %v40 = vcvt.s32.f32 %v38
      %v41 = vcvt.s32.f32 %v39
      %v42 = vpack.c.bf16 %v41, %v40
      %v44 = vunpack.c.l.b16 %v42
      %v45 = vunpack.c.h.b16 %v42
      %v46 = vpack.c.b16 %v44, %v44
      %v47 = vpack.c.b16 %v45, %v45
      %vm50 = vcmask 125952
      %51 = vst.msk [vmem:[#allocation5] sm:$0xf] %vm50, %v46
      %52 = vst.msk [vmem:[#allocation5 + $0x4] sm:$0xf] %vm50, %v47
    $region13: #{tpu_custom_call.1} parent=1 // pred_fallthru
      _
    %v53 = vld [vmem:[#allocation2] sm:$0x1]
    %v54 = vld [vmem:[%s0] sm:$0xff]
    %v55 = vld [vmem:[%s0 + $0x8] sm:$0xff]
    %v56 = vld [vmem:[%s1] sm:$0xff]
    %v57 = vld [vmem:[%s1 + $0x8] sm:$0xff]
    %v58 = vld [vmem:[%s1 + $0x10] sm:$0xff]
    %v59 = vld [vmem:[%s1 + $0x18] sm:$0xff]
    %vm60 = vcmask 261120
    %v62 = vsel %vm60, %v54, 0
    %v65 = vsel %vm60, %v55, 0
    %67 = vmatprep.subr.mxu0 0.0
    %68 = vmatpush1.msra.mxu0 0.0
    %69 = vmatprep.subr.mxu0 0.0
    %70 = vmatpush1.msra.mxu0 0.0
    %71 = vmatprep.subr.mxu0 0.0
    %72 = vmatpush1.msra.mxu0 0.0
    %73 = vmatprep.subr.mxu0 0.0
    %74 = vmatpush1.msra.mxu0 0.0
    %75 = vmatprep.subr.mxu0 0.0
    %76 = vmatpush1.msra.mxu0 0.0
    %77 = vmatprep.subr.mxu0 0.0
    %78 = vmatpush1.msra.mxu0 0.0
    %79 = vmatprep.subr.mxu0 0.0
    %80 = vmatpush1.msra.mxu0 0.0
    %81 = vmatprep.subr.mxu0 0.0
    %82 = vmatpush1.msra.mxu0 0.0
    %83 = vmatprep.subr.mxu0 0.0
    %84 = vmatpush1.msra.mxu0 0.0
    %85 = vmatprep.subr.mxu0 0.0
    %86 = vmatpush1.msra.mxu0 0.0
    %87 = vmatprep.subr.mxu0 0.0
    %88 = vmatpush1.msra.mxu0 0.0
    %89 = vmatprep.subr.mxu0 0.0
    %90 = vmatpush1.msra.mxu0 0.0
    %91 = vmatprep.subr.mxu0 0.0
    %92 = vmatpush1.msra.mxu0 %v59
    %93 = vmatprep.subr.mxu0 0.0
    %94 = vmatpush1.msra.mxu0 %v58
    %95 = vmatprep.subr.mxu0 0.0
    %96 = vmatpush1.msra.mxu0 %v57
    %97 = vmatprep.subr.mxu0 0.0
    %98 = vmatpush1.msra.mxu0 %v56
    %99 = vmatprep.subr.mxu0 0.0
    %100 = vmatpush2.msra.mxu0 0.0
    %101 = vmatprep.subr.mxu0 0.0
    %102 = vmatpush2.msra.mxu0 0.0
    %103 = vmatprep.subr.mxu0 0.0
    %104 = vmatpush2.msra.mxu0 0.0
    %105 = vmatprep.subr.mxu0 0.0
    %106 = vmatpush2.msra.mxu0 0.0
    %107 = vmatprep.subr.mxu0 0.0
    %108 = vmatpush2.msra.mxu0 0.0
    %109 = vmatprep.subr.mxu0 0.0
    %110 = vmatpush2.msra.mxu0 0.0
    %111 = vmatprep.subr.mxu0 0.0
    %112 = vmatpush2.msra.mxu0 0.0
    %113 = vmatprep.subr.mxu0 0.0
    %114 = vmatpush2.msra.mxu0 0.0
    %115 = vmatprep.subr.mxu0 0.0
    %116 = vmatpush2.msra.mxu0 0.0
    %117 = vmatprep.subr.mxu0 0.0
    %118 = vmatpush2.msra.mxu0 0.0
    %119 = vmatprep.subr.mxu0 0.0
    %120 = vmatpush2.msra.mxu0 0.0
    %121 = vmatprep.subr.mxu0 0.0
    %122 = vmatpush2.msra.mxu0 0.0
    %123 = vmatprep.subr.mxu0 0.0
    %124 = vmatpush2.msra.mxu0 0.0
    %125 = vmatprep.subr.mxu0 0.0
    %126 = vmatpush2.msra.mxu0 0.0
    %127 = vmatprep.subr.mxu0 0.0
    %128 = vmatpush2.msra.mxu0 0.0
    %129 = vmatprep.subr.mxu0 0.0
    %130 = vmatpush2.msra.mxu0 0.0
    %131 = vmatprep.mubr.f32.mxu0 0.0
    %132 = vmatmul.mubr.f32.gmra.mxu0 %v62
    %v133 = vpop.f32.mrf.mxu0
    %v134 = vadd.f32 0.0, %v133
    %v135 = vpop.f32.mrf.mxu0
    %136 = vmatprep.mubr.f32.mxu0 0.0
    %137 = vmatmul.mubr.f32.gmra.mxu0 %v65
    %v138 = vpop.f32.mrf.mxu0
    %v139 = vadd.f32 0.0, %v138
    %v140 = vpop.f32.mrf.mxu0
    %141 = vdwg.mxu0
    %vm142 = vcmask 31744
    %v143 = vsel %vm142, %v134, -inf
    %144 = vmax.xlane.f32.xlu0 %v143
    %v145 = vpop.xlane.xlu0 %144
    %v146 = vsel %vm142, %v139, -inf
    %147 = vmax.xlane.f32.xlu0 %v146
    %v148 = vpop.xlane.xlu0 %147
    %v149 = vsub.f32 %v134, %v145
    %v150 = vsub.f32 %v139, %v148
    %v151 = vmul.f32 %v149, 1.442695
    %v152 = vpow.pop %v151
    %v153 = vmul.f32 %v150, 1.442695
    %v154 = vpow.pop %v153
    %v155 = vsel %vm142, %v152, 0.0
    %156 = vadd.xlane.f32.xlu0 %v155
    %v157 = vpop.xlane.xlu0 %156
    %v158 = vsel %vm142, %v154, 0.0
    %159 = vadd.xlane.f32.xlu0 %v158
    %v160 = vpop.xlane.xlu0 %159
    %v161 = vrcp.pop %v157
    %v162 = vmul.f32 %v152, %v161
    %v163 = vrcp.pop %v160
    %v164 = vmul.f32 %v154, %v163
    %v165 = vlaneseq
    %v166 = vand.u32 %v165, 127
    %v167 = vsel %vm142, %v162, -inf
    %168 = vmax.xlane.f32.xlu0 %v167
    %v169 = vpop.xlane.xlu0 %168
    %v170 = vsel %vm142, %v164, -inf
    %171 = vmax.xlane.f32.xlu0 %v170
    %v172 = vpop.xlane.xlu0 %171
    %vm173 = vcmp.ge.f32.partialorder %v162, %v169
    %vm174 = vcmp.ge.f32.partialorder %v164, %v172
    %v175 = vsel %vm173, %v166, 4
    %v176 = vsel %vm174, %v166, 4
    %v177 = vsel %vm142, %v175, 2147483647
    %v178 = vand.u32 %v177, 65535
    %v179 = vshra.s32 %v177, 16
    %v180 = vcvt.s32.f32 %v178
    %v181 = vcvt.s32.f32 %v179
    %182 = vmin.xlane.f32.xlu0 %v181
    %v183 = vpop.xlane.xlu0 %182
    %vm184 = vcmp.eq.f32.partialorder %v181, %v183
    %v185 = vsel %vm184, %v180, inf
    %186 = vmin.xlane.f32.xlu0 %v185
    %v187 = vpop.xlane.xlu0 %186
    %v188 = vcvt.f32.s32 %v187
    %v189 = vcvt.f32.s32 %v183
    %v190 = vshll.u32 %v189, 16
    %v191 = vadd.s32 %v190, %v188
    %v192 = vsel %vm142, %v176, 2147483647
    %v193 = vand.u32 %v192, 65535
    %v194 = vshra.s32 %v192, 16
    %v195 = vcvt.s32.f32 %v193
    %v196 = vcvt.s32.f32 %v194
    %197 = vmin.xlane.f32.xlu0 %v196
    %v198 = vpop.xlane.xlu0 %197
    %vm199 = vcmp.eq.f32.partialorder %v196, %v198
    %v200 = vsel %vm199, %v195, inf
    %201 = vmin.xlane.f32.xlu0 %v200
    %v202 = vpop.xlane.xlu0 %201
    %v203 = vcvt.f32.s32 %v202
    %v204 = vcvt.f32.s32 %v198
    %v205 = vshll.u32 %v204, 16
    %v206 = vadd.s32 %v205, %v203
    %vm207 = vcmp.eq.s32.totalorder %v166, %v191
    %vm208 = vcmp.eq.s32.totalorder %v166, %v206
    %v209 = vsel %vm207, 1, 0
    %v210 = vsel %vm208, 1, 0
    %v211 = vcvt.s32.f32 %v209
    %v212 = vcvt.s32.f32 %v210
    %v213 = vmax.f32 %v162, 1.1754944e-38
    %v214 = vmax.f32 %v164, 1.1754944e-38
    %v215 = vmin.f32 %v213, 1.0
    %v216 = vmin.f32 %v214, 1.0
    %v217 = vlog2.pop %v215
    %v218 = vmul.f32 %v217, 0.6931472
    %v219 = vlog2.pop %v216
    %v220 = vmul.f32 %v219, 0.6931472
    %v221 = vmul.f32 %v162, %v218
    %v222 = vmul.f32 %v164, %v220
    %v223 = vsel %vm142, %v221, 0.0
    %224 = vadd.xlane.f32.xlu0 %v223
    %v225 = vpop.xlane.xlu0 %224
    %v226 = vsel %vm142, %v222, 0.0
    %227 = vadd.xlane.f32.xlu0 %v226
    %v228 = vpop.xlane.xlu0 %227
    %v229 = vsub.f32 0.0, %v225
    %v230 = vsub.f32 0.0, %v228
    %v231 = vld [vmem:[#allocation4] sm:$0x1]
    %v232 = vadd.f32 %v229, %v230
    %v233 = vrot.slane %v232, 4
    %v234 = vadd.f32 %v232, %v233
    %v235 = vrot.slane %v234, 2
    %v236 = vadd.f32 %v234, %v235
    %v237 = vrot.slane %v236, 1
    %v238 = vadd.f32 %v236, %v237
    %v239 = vadd.f32 %v231, %v238
    %vm240 = vcmask 0
    %241 = vst.msk [vmem:[#allocation4] sm:$0x1] %vm240, %v239
    %v242 = vld [vmem:[#allocation3] sm:$0x1]
    %v243 = vsel %vm142, %v162, 0.0
    %v244 = vsel %vm142, %v164, 0.0
    %v245 = vadd.f32 %v243, %v244
    %v246 = vrot.slane %v245, 4
    %v247 = vadd.f32 %v245, %v246
    %v248 = vrot.slane %v247, 2
    %v249 = vadd.f32 %v247, %v248
    %v250 = vrot.slane %v249, 1
    %v251 = vadd.f32 %v249, %v250
    %v252 = vadd.f32 %v242, %v251
    %vm253 = vcmask 24576
    %254 = vst.msk [vmem:[#allocation3] sm:$0x1] %vm253, %v252
    %v255 = vsel %vm142, %v211, 0.0
    %v256 = vsel %vm142, %v212, 0.0
    %v257 = vadd.f32 %v255, %v256
    %v258 = vrot.slane %v257, 4
    %v259 = vadd.f32 %v257, %v258
    %v260 = vrot.slane %v259, 2
    %v261 = vadd.f32 %v259, %v260
    %v262 = vrot.slane %v261, 1
    %v263 = vadd.f32 %v261, %v262
    %v264 = vadd.f32 %v53, %v263
    %265 = vst.msk [vmem:[#allocation2] sm:$0x1] %vm253, %v264
    %v266 = vld [vmem:[#allocation5] sm:$0xf]
    %v267 = vld [vmem:[#allocation5 + $0x4] sm:$0xf]
    %v268 = vpack.c.bf16 %v212, %v211
    %v271 = vunpack.c.l.b16 %v266
    %v272 = vunpack.c.l.b16 %v267
    %v273 = vpack.c.b16 %v272, %v271
    %vm274 = vcmask 130048
    %v276 = vsel %vm274, %v273, 0
    %278 = vmatprep.subr.bf16.mxu0 0
    %279 = vmatpush1.bf16.msra.mxu0 0
    %280 = vmatprep.subr.bf16.mxu0 0
    %281 = vmatpush1.bf16.msra.mxu0 0
    %282 = vmatprep.subr.bf16.mxu0 0
    %283 = vmatpush1.bf16.msra.mxu0 0
    %284 = vmatprep.subr.bf16.mxu0 0
    %285 = vmatpush1.bf16.msra.mxu0 0
    %286 = vmatprep.subr.bf16.mxu0 0
    %287 = vmatpush1.bf16.msra.mxu0 0
    %288 = vmatprep.subr.bf16.mxu0 0
    %289 = vmatpush1.bf16.msra.mxu0 0
    %290 = vmatprep.subr.bf16.mxu0 0
    %291 = vmatpush1.bf16.msra.mxu0 0
    %292 = vmatprep.subr.bf16.mxu0 0
    %293 = vmatpush1.bf16.msra.mxu0 %v268
    %294 = vmatprep.subr.bf16.mxu0 0
    %295 = vmatpush2.bf16.msra.mxu0 0
    %296 = vmatprep.subr.bf16.mxu0 0
    %297 = vmatpush2.bf16.msra.mxu0 0
    %298 = vmatprep.subr.bf16.mxu0 0
    %299 = vmatpush2.bf16.msra.mxu0 0
    %300 = vmatprep.subr.bf16.mxu0 0
    %301 = vmatpush2.bf16.msra.mxu0 0
    %302 = vmatprep.subr.bf16.mxu0 0
    %303 = vmatpush2.bf16.msra.mxu0 0
    %304 = vmatprep.subr.bf16.mxu0 0
    %305 = vmatpush2.bf16.msra.mxu0 0
    %306 = vmatprep.subr.bf16.mxu0 0
    %307 = vmatpush2.bf16.msra.mxu0 0
    %308 = vmatprep.subr.bf16.mxu0 0
    %309 = vmatpush2.bf16.msra.mxu0 0
    %310 = vmatprep.mubr.bf16.mxu0 0
    %311 = vmatmul.mubr.bf16.gmra.mxu0 %v276
    %v312 = vpop.f32.mrf.mxu0
    %v313 = vadd.f32 0.0, %v312
    %v314 = vpop.f32.mrf.mxu0
    %v315 = vpop.f32.mrf.mxu0
    %v316 = vadd.f32 0.0, %v315
    %v317 = vpop.f32.mrf.mxu0
    %318 = vdwg.mxu0
    %v319 = vsub.f32 %v313, 1.0
    %v320 = vsub.f32 %v316, 1.0
    %v322 = vlaneseq
    %v323 = vshrl.u32 %v322, 7
    %v324 = vsub.s32 0, %v323
    %v325 = vrot.slane %v53, %v324
    %v327 = vadd.f32 %v319, %v325
    %v328 = vadd.f32 %v320, %v325
    %v329 = vmul.f32 %v162, %v211
    %v330 = vmul.f32 %v164, %v212
    %v331 = vsel %vm142, %v329, 0.0
    %332 = vadd.xlane.f32.xlu0 %v331
    %v333 = vpop.xlane.xlu0 %332
    %v334 = vsel %vm142, %v330, 0.0
    %335 = vadd.xlane.f32.xlu0 %v334
    %v336 = vpop.xlane.xlu0 %335
    %vm337 = vcmp.lt.f32.partialorder %v327, 4.0
    %vm338 = vcmp.lt.f32.partialorder %v328, 4.0
    %v339 = vsel %vm337, 1, 0
    %v340 = vsel %vm338, 1, 0
    %v341 = vcvt.s32.f32 %v339
    %v342 = vcvt.s32.f32 %v340
    %v343 = vmul.f32 %v211, %v341
    %v344 = vmul.f32 %v212, %v342
    %v345 = vsel %vm142, %v343, 0.0
    %346 = vadd.xlane.f32.xlu0 %v345
    %v347 = vpop.xlane.xlu0 %346
    %v348 = vsel %vm142, %v344, 0.0
    %349 = vadd.xlane.f32.xlu0 %v348
    %v350 = vpop.xlane.xlu0 %349
    %v351 = vmul.f32 %v327, %v343
    %v352 = vmul.f32 %v328, %v344
    %v353 = vsel %vm142, %v351, 0.0
    %354 = vadd.xlane.f32.xlu0 %v353
    %v355 = vpop.xlane.xlu0 %354
    %v356 = vsel %vm142, %v352, 0.0
    %357 = vadd.xlane.f32.xlu0 %v356
    %v358 = vpop.xlane.xlu0 %357
    %vm359 = vcmp.gt.f32.partialorder %v347, 0.0
    %vm360 = vcmp.gt.f32.partialorder %v350, 0.0
    %v361 = vmul.u32 %v191, 4
    %v362 = vmul.u32 %v206, 4
    %v363 = vcvt.f32.s32.to.zero.pseudo %v355
    %v364 = vcvt.f32.s32.to.zero.pseudo %v358
    %v365 = vadd.s32 %v361, %v363
    %v366 = vadd.s32 %v362, %v364
    %v367 = vsel %vm359, %v365, 4294967295
    %v368 = vsel %vm360, %v366, 4294967295
    %vm369 = vcmp.eq.s32.totalorder %v166, %v367
    %vm370 = vcmp.eq.s32.totalorder %v166, %v368
    %v371 = vsel %vm369, %v333, 0.0
    %v372 = vsel %vm370, %v336, 0.0
    %373 = vst.msk [vmem:[#allocation6] sm:$0xff] %vm274, %v371
    %374 = vst.msk [vmem:[#allocation6 + $0x8] sm:$0xff] %vm274, %v372
    %vm375 = vcmp.ne.f32.partialorder %v371, 0.0
    %vm376 = vcmp.ne.f32.partialorder %v372, 0.0
    %vm377 = vmpackc.low %vm376, %vm375
    %vm378 = vmpackc.even %vm377, %vm377
    %v379 = vsel %vm378, 16843009, 0
    %v380 = vunpack.c.0.s8 %v379
    %v381 = vunpack.c.1.s8 %v379
    %v382 = vpack.c.b16 %v380, %v380
    %v383 = vpack.c.b8 %v382, %v382
    %v384 = vpack.c.b16 %v381, %v381
    %v385 = vpack.c.b8 %v384, %v384
    %vm386 = vcmask 123904
    %387 = vst.msk [vmem:[#allocation8] sm:$0x3] %vm386, %v383
    %388 = vst.msk [vmem:[#allocation8 + $0x2] sm:$0x3] %vm386, %v385
    // Predicated region
    $region14: #{tpu_custom_call.1} parent=1 // pred_check
      %p389 = pneg %p22
    $region15: #{tpu_custom_call.1} parent=1 // pred_check_branch
      %391 = sbr.rel (%p389) target = $region17
    $region16: #{tpu_custom_call.1} parent=1 // pred_region
      %v392 = vld [vmem:[#allocation3] sm:$0x1]
      %v393 = vmul.f32 %v392, 0.0625
      %v394 = vld [vmem:[#allocation2] sm:$0x1]
      %v395 = vmul.f32 %v394, 0.0625
      %v396 = vmul.f32 %v393, %v395
      %v397 = vsel %vm253, %v396, 0.0
      %398 = vadd.xlane.f32.xlu0 %v397
      %v399 = vpop.xlane.xlu0 %398
      %v400 = vmul.f32 %v399, 4.0
      %401 = vst.msk [vmem:[#allocation10] sm:$0x1] %vm240, %v400
      %v402 = vld [vmem:[#allocation2] sm:$0x1]
      %403 = vst.msk [vmem:[#allocation11] sm:$0x1] %vm253, %v402
      %v404 = vld [vmem:[#allocation4] sm:$0x1]
      %405 = vst.msk [vmem:[#allocation13] sm:$0x1] %vm240, %v404
    $region17: #{tpu_custom_call.1} parent=1 // pred_fallthru
      _
    // Predicated region
    $region18: #{tpu_custom_call.1} parent=1 // pred_check
      _
    $region19: #{tpu_custom_call.1} parent=1 // pred_check_branch
      %407 = sbr.rel (0) target = $region21
    $region20: #{tpu_custom_call.1} parent=1 // pred_region
      %s409 = ssub.s32 256, 256
      %410 = vsyncadd [#allocation7], %s409
      %s411 = sshll.u32 [#allocation6], 4
      %s412 = int_to_ptr.vmem [resolvable:$true] %s411
      %417 = dma.vmem_to_hbm [thread:$0]  %s412, 256, %s2, [#allocation7], 128, 128, 8
    $region21: #{tpu_custom_call.1} parent=1 // pred_fallthru
      _
    // Predicated region
    $region22: #{tpu_custom_call.1} parent=1 // pred_check
      _
    $region23: #{tpu_custom_call.1} parent=1 // pred_check_branch
      %419 = sbr.rel (0) target = $region25
    $region24: #{tpu_custom_call.1} parent=1 // pred_region
      %s421 = ssub.s32 64, 64
      %422 = vsyncadd [#allocation9], %s421
      %s423 = sshll.u32 [#allocation8], 4
      %s424 = int_to_ptr.vmem [resolvable:$true] %s423
      %429 = dma.vmem_to_hbm [thread:$0]  %s424, 64, %s3, [#allocation9], 32, 32, 2
    $region25: #{tpu_custom_call.1} parent=1 // pred_fallthru
      _
    // Predicated region
    $region26: #{tpu_custom_call.1} parent=1 // pred_check
      _
    $region27: #{tpu_custom_call.1} parent=1 // pred_check_branch
      %431 = sbr.rel (0) target = $region29
    $region28: #{tpu_custom_call.1} parent=1 // pred_region
      %s433 = ssub.s32 16, 16
      %434 = vsyncadd [#allocation9], %s433
      %s436 = sshll.u32 [#allocation10], 4
      %s437 = int_to_ptr.vmem [resolvable:$true] %s436
      %439 = dma.vmem_to_hbm [thread:$0]  %s437, 16, %s4, [#allocation9]
    $region29: #{tpu_custom_call.1} parent=1 // pred_fallthru
      _
    // Predicated region
    $region30: #{tpu_custom_call.1} parent=1 // pred_check
      _
    $region31: #{tpu_custom_call.1} parent=1 // pred_check_branch
      %441 = sbr.rel (0) target = $region33
    $region32: #{tpu_custom_call.1} parent=1 // pred_region
      %s443 = ssub.s32 16, 16
      %444 = vsyncadd [#allocation12], %s443
      %s446 = sshll.u32 [#allocation11], 4
      %s447 = int_to_ptr.vmem [resolvable:$true] %s446
      %449 = dma.vmem_to_hbm [thread:$0]  %s447, 16, %s5, [#allocation12]
    $region33: #{tpu_custom_call.1} parent=1 // pred_fallthru
      _
    // Predicated region
    $region34: #{tpu_custom_call.1} parent=1 // pred_check
      _
    $region35: #{tpu_custom_call.1} parent=1 // pred_check_branch
      %451 = sbr.rel (0) target = $region37
    $region36: #{tpu_custom_call.1} parent=1 // pred_region
      %s453 = ssub.s32 16, 16
      %454 = vsyncadd [#allocation12], %s453
      %s456 = sshll.u32 [#allocation13], 4
      %s457 = int_to_ptr.vmem [resolvable:$true] %s456
      %459 = dma.vmem_to_hbm [thread:$0]  %s457, 16, %s6, [#allocation12]
    $region37: #{tpu_custom_call.1} parent=1 // pred_fallthru
      _
    // Predicated region
    $region38: #{tpu_custom_call.1} parent=1 // pred_check
      _
    $region39: #{tpu_custom_call.1} parent=1 // pred_check_branch
      %461 = sbr.rel (0) target = $region41
    $region40: #{tpu_custom_call.1} parent=1 // pred_region
      %462 = dma.done [#allocation7], 256
    $region41: #{tpu_custom_call.1} parent=1 // pred_fallthru
      _
    // Predicated region
    $region42: #{tpu_custom_call.1} parent=1 // pred_check
      _
    $region43: #{tpu_custom_call.1} parent=1 // pred_check_branch
      %464 = sbr.rel (0) target = $region45
    $region44: #{tpu_custom_call.1} parent=1 // pred_region
      %465 = dma.done [#allocation9], 64
    $region45: #{tpu_custom_call.1} parent=1 // pred_fallthru
      _
    // Predicated region
    $region46: #{tpu_custom_call.1} parent=1 // pred_check
      _
    $region47: #{tpu_custom_call.1} parent=1 // pred_check_branch
      %467 = sbr.rel (0) target = $region49
    $region48: #{tpu_custom_call.1} parent=1 // pred_region
      %468 = dma.done [#allocation9], 16
    $region49: #{tpu_custom_call.1} parent=1 // pred_fallthru
      _
    // Predicated region
    $region50: #{tpu_custom_call.1} parent=1 // pred_check
      _
    $region51: #{tpu_custom_call.1} parent=1 // pred_check_branch
      %470 = sbr.rel (0) target = $region53
    $region52: #{tpu_custom_call.1} parent=1 // pred_region
      %471 = dma.done [#allocation12], 16
    $region53: #{tpu_custom_call.1} parent=1 // pred_fallthru
      _
    // Predicated region
    $region54: #{tpu_custom_call.1} parent=1 // pred_check
      _
    $region55: #{tpu_custom_call.1} parent=1 // pred_check_branch
      %473 = sbr.rel (0) target = $region57
    $region56: #{tpu_custom_call.1} parent=1 // pred_region
      %474 = dma.done [#allocation12], 16
    $region57: #{tpu_custom_call.1} parent=1 // pred_fallthru
      _
    %475 = vsyncpa [#allocation7], 1
    %476 = vsyncpa [#allocation9], 1
    %477 = vsyncpa [#allocation12], 1

</llo_original>
